<compile_context>
chip_gen: v7x
topology: tpu7x:2x2x1
jax: 0.10.0
libtpu: 0.0.40
codegen_flags: <defaults>
</compile_context>

<pallas_src>
import functools

import jax
import jax.numpy as jnp
from jax.experimental import pallas as pl
from jax.experimental.pallas import tpu as pltpu


def _exp_at_hinge_kernel(xn_ref, xt_ref, ap_ref, an_ref, hinge_ref, *, margin):
    """One grid step = tm anchor rows.

    xn_ref    : (n, d_pad)   pre-normalized batch (resident, constant block idx)
    xt_ref    : (d_pad, tm)  this step's anchor rows, pre-transposed (pipelined)
    ap_ref    : (1, tm) i32  column index of the picked positive per anchor row
    an_ref    : (1, tm) i32  column index of the picked negative per anchor row
    hinge_ref : (1, tm) f32  per-row hinge output (lane-dense)
    """
    n = xn_ref.shape[0]
    tm = hinge_ref.shape[1]

    # Transposed similarity strip: simT[j, r] = <xn[j], xn[anchor row r]>.
    # NN matmul (contraction over d, no in-kernel transpose), f32 accumulation.
    simT = jax.lax.dot_general(
        xn_ref[...], xt_ref[...], (((1,), (0,)), ((), ())),
        preferred_element_type=jnp.float32)                       # (n, tm)

    # One-hot gather of the picked positive / negative column per anchor row.
    # relu commutes with a one-hot pick, so it is applied to the gathered
    # (1, tm) values instead of the whole (n, tm) strip.
    col = jax.lax.broadcasted_iota(jnp.int32, (n, tm), 0)          # col[j,r]=j
    d_ap = jnp.sum(jnp.where(col == ap_ref[...], simT, 0.0),
                   axis=0, keepdims=True)                          # (1, tm)
    d_an = jnp.sum(jnp.where(col == an_ref[...], simT, 0.0),
                   axis=0, keepdims=True)                          # (1, tm)
    d_ap = jnp.maximum(d_ap, 0.0)
    d_an = jnp.maximum(d_an, 0.0)

    # MarginRankingLoss hinge per row (y = 1), lane-dense store.
    hinge_ref[...] = jnp.maximum(0.0, margin - (d_ap - d_an))


def exp_at_loss(inputs, targets, ap_idx, an_idx, *, margin=1.0,
                block_rows=128, use_bf16_matmul=True):
    """inputs: (n, d) f32; targets: (n,) int; ap_idx/an_idx: (n,) int picks
    (ap_idx[i] in [0, #positives_of_row_i), an_idx[i] in [0, #negatives))."""
    n, d = inputs.shape
    tm = n if n <= block_rows else block_rows
    if n % tm:
        # TODO(synk): pad the row axis to a multiple of the block for ragged n.
        raise ValueError(f"n={n} must be a multiple of the row block {tm}")

    # --- normalize ONCE in XLA (rsqrt form), pad d to a lane-dense 128-mult --
    x = inputs.astype(jnp.float32)
    sumsq = jnp.sum(x * x, axis=-1, keepdims=True)
    xn = x * jax.lax.rsqrt(jnp.maximum(sumsq, 1e-24))  # == x / max(||x||,1e-12)
    d_pad = ((d + 127) // 128) * 128
    if d_pad != d:
        xn = jnp.pad(xn, ((0, 0), (0, d_pad - d)))     # zero cols: dots unchanged
    mm_dtype = jnp.bfloat16 if use_bf16_matmul else jnp.float32
    xn_c = xn.astype(mm_dtype)          # resident LHS (half VMEM/DMA when bf16)
    xn_t = xn_c.T                       # (d_pad, n): anchor blocks as NN RHS

    # --- resolve the masked k-th-element picks to plain column indices -------
    # (pure int32 math in the wrapper; no in-kernel prefix-sum gather)
    t = targets.astype(jnp.int32)
    same = t[:, None] == t[None, :]
    offdiag = ~jnp.eye(n, dtype=bool)
    pos_mask = same & offdiag                 # mask[i] * diag[i]
    neg_mask = ~same                          # mask[i] == 0
    cum_p = jnp.cumsum(pos_mask.astype(jnp.int32), axis=1)
    cum_n = jnp.cumsum(neg_mask.astype(jnp.int32), axis=1)
    sel_p = pos_mask & (cum_p == (ap_idx.astype(jnp.int32)[:, None] + 1))
    sel_n = neg_mask & (cum_n == (an_idx.astype(jnp.int32)[:, None] + 1))
    # NOTE: rows with no valid positive (singleton class) fall back to column 0;
    # torch would raise in that case.  Fine for structured bs/pre_id batches.
    ap_col = jnp.argmax(sel_p, axis=1).astype(jnp.int32).reshape(1, n)
    an_col = jnp.argmax(sel_n, axis=1).astype(jnp.int32).reshape(1, n)

    # --- explicit VMEM budget: resident batch (1 buf) + pipelined block (2) --
    bpe = 2 if use_bf16_matmul else 4
    est = (n * d_pad * bpe                 # resident normalized batch (1 buffer)
           + 2 * d_pad * tm * bpe          # anchor block, double-buffered
           + 4 * n * tm * 4                # strip + iota + select temporaries
           + 2 * 4 * tm * 4)               # small (1,tm) vectors, double-buffered
    vmem_limit = int(min(max(2 * est, 32 << 20), 64 << 20))  # v7x-safe ceiling

    kernel = functools.partial(_exp_at_hinge_kernel, margin=float(margin))
    hinge = pl.pallas_call(
        kernel,
        grid=(n // tm,),
        in_specs=[
            # Full normalized batch: constant block index -> resident; one
            # buffer suffices (saves n*d_pad*bpe bytes vs default double-buffer).
            pl.BlockSpec((n, d_pad), lambda i: (0, 0),
                         pipeline_mode=pl.Buffered(1)),
            # Anchor block, pre-transposed in the wrapper -> NN matmul, pipelined.
            pl.BlockSpec((d_pad, tm), lambda i: (0, i)),
            pl.BlockSpec((1, tm), lambda i: (0, i)),    # ap columns, lane-dense
            pl.BlockSpec((1, tm), lambda i: (0, i)),    # an columns, lane-dense
        ],
        out_specs=pl.BlockSpec((1, tm), lambda i: (0, i)),
        out_shape=jax.ShapeDtypeStruct((1, n), jnp.float32),
        compiler_params=pltpu.CompilerParams(
            dimension_semantics=("parallel",),
            vmem_limit_bytes=vmem_limit),
    )(xn_c, xn_t, ap_col, an_col)

    # Tiny scalar epilogue (mean over n rows + exp) finished outside the
    # parallel-grid kernel.
    return jnp.exp(jnp.mean(hinge))


if __name__ == "__main__":
    # Module constructor args: bs = batch size, pre_id = samples per identity.
    bs, pre_id, d = 8, 4, 32

    key = jax.random.PRNGKey(0)
    k_x, k_ap, k_an = jax.random.split(key, 3)

    inputs = jax.random.normal(k_x, (bs, d), dtype=jnp.float32)
    # Structured batch assumed by the module: bs // pre_id identities,
    # pre_id consecutive samples per identity.
    targets = jnp.repeat(jnp.arange(bs // pre_id, dtype=jnp.int32), pre_id)

    # TODO(synk): torch.randint inside forward replaced by deterministic
    # jax.random picks (same ranges: [0, pre_id-1) and [0, bs-pre_id)).
    ap_idx = jax.random.randint(k_ap, (bs,), 0, pre_id - 1, dtype=jnp.int32)
    an_idx = jax.random.randint(k_an, (bs,), 0, bs - pre_id, dtype=jnp.int32)

    out = exp_at_loss(inputs, targets, ap_idx, an_idx, margin=1.0)
    jax.block_until_ready(out)
    print("KERNEL_OK")
</pallas_src>

<mosaic_0001>
module attributes {stable_mosaic.version = 11 : i64} {
  func.func @_exp_at_hinge_kernel(%arg0: i32, %arg1: memref<8x128xbf16, #tpu.memory_space<vmem>>, %arg2: memref<128x8xbf16, #tpu.memory_space<vmem>>, %arg3: memref<1x8xi32, #tpu.memory_space<vmem>>, %arg4: memref<1x8xi32, #tpu.memory_space<vmem>>, %arg5: memref<1x8xf32, #tpu.memory_space<vmem>>) attributes {dimension_semantics = [#tpu.dimension_semantics<parallel>], iteration_bounds = array<i64: 1>, scalar_prefetch = 0 : i64, scratch_operands = 0 : i64, tpu.core_type = #tpu.core_type<tc>, window_params = [{pipeline_mode = #tpu.pipeline_mode<synchronous>, transform_indices = @transform_0, window_bounds = array<i64: 8, 128>}, {transform_indices = @transform_1, window_bounds = array<i64: 128, 8>}, {transform_indices = @transform_2, window_bounds = array<i64: 1, 8>}, {transform_indices = @transform_3, window_bounds = array<i64: 1, 8>}, {transform_indices = @transform_4, window_bounds = array<i64: 1, 8>}]} {
    %c0 = arith.constant 0 : index
    %c0_0 = arith.constant 0 : index
    %0 = vector.load %arg1[%c0, %c0_0] : memref<8x128xbf16, #tpu.memory_space<vmem>>, vector<8x128xbf16>
    %c0_1 = arith.constant 0 : index
    %c0_2 = arith.constant 0 : index
    %1 = vector.load %arg2[%c0_1, %c0_2] : memref<128x8xbf16, #tpu.memory_space<vmem>>, vector<128x8xbf16>
    %cst = arith.constant dense<0.000000e+00> : vector<8x8xf32>
    %2 = tpu.matmul %0, %1, %cst {dimension_numbers = #tpu.dot_dimension_numbers<[1], [0], [0], [1], [0, 0, 1, 1], [], []>} : vector<8x128xbf16>, vector<128x8xbf16>, vector<8x8xf32> -> vector<8x8xf32>
    %3 = tpu.iota {dimensions = array<i32: 0>} : vector<8x8xi32>
    %c0_3 = arith.constant 0 : index
    %c0_4 = arith.constant 0 : index
    %4 = vector.load %arg3[%c0_3, %c0_4] : memref<1x8xi32, #tpu.memory_space<vmem>>, vector<1x8xi32>
    %5 = vector.broadcast %4 : vector<1x8xi32> to vector<8x8xi32>
    %6 = arith.cmpi eq, %3, %5 : vector<8x8xi32>
    %cst_5 = arith.constant 0.000000e+00 : f32
    %7 = vector.broadcast %cst_5 : f32 to vector<8x8xf32>
    %8 = arith.select %6, %2, %7 : vector<8x8xi1>, vector<8x8xf32>
    %cst_6 = arith.constant dense<0.000000e+00> : vector<8xf32>
    %9 = vector.multi_reduction <add>, %8, %cst_6 [0] : vector<8x8xf32> to vector<8xf32>
    %10 = vector.shape_cast %9 : vector<8xf32> to vector<1x8xf32>
    %c0_7 = arith.constant 0 : index
    %c0_8 = arith.constant 0 : index
    %11 = vector.load %arg4[%c0_7, %c0_8] : memref<1x8xi32, #tpu.memory_space<vmem>>, vector<1x8xi32>
    %12 = vector.broadcast %11 : vector<1x8xi32> to vector<8x8xi32>
    %13 = arith.cmpi eq, %3, %12 : vector<8x8xi32>
    %cst_9 = arith.constant 0.000000e+00 : f32
    %14 = vector.broadcast %cst_9 : f32 to vector<8x8xf32>
    %15 = arith.select %13, %2, %14 : vector<8x8xi1>, vector<8x8xf32>
    %cst_10 = arith.constant dense<0.000000e+00> : vector<8xf32>
    %16 = vector.multi_reduction <add>, %15, %cst_10 [0] : vector<8x8xf32> to vector<8xf32>
    %17 = vector.shape_cast %16 : vector<8xf32> to vector<1x8xf32>
    %cst_11 = arith.constant 0.000000e+00 : f32
    %18 = vector.broadcast %cst_11 : f32 to vector<1x8xf32>
    %19 = arith.maximumf %10, %18 : vector<1x8xf32>
    %cst_12 = arith.constant 0.000000e+00 : f32
    %20 = vector.broadcast %cst_12 : f32 to vector<1x8xf32>
    %21 = arith.maximumf %17, %20 : vector<1x8xf32>
    %22 = arith.subf %19, %21 : vector<1x8xf32>
    %cst_13 = arith.constant 1.000000e+00 : f32
    %23 = vector.broadcast %cst_13 : f32 to vector<1x8xf32>
    %24 = arith.subf %23, %22 : vector<1x8xf32>
    %cst_14 = arith.constant 0.000000e+00 : f32
    %25 = vector.broadcast %cst_14 : f32 to vector<1x8xf32>
    %26 = arith.maximumf %25, %24 : vector<1x8xf32>
    %c0_15 = arith.constant 0 : index
    %c0_16 = arith.constant 0 : index
    %27 = vector.load %arg5[%c0_15, %c0_16] : memref<1x8xf32, #tpu.memory_space<vmem>>, vector<1x8xf32>
    tpu.vector_store %arg5[%c0_15, %c0_16], %26 {strides = array<i32>} : memref<1x8xf32, #tpu.memory_space<vmem>>, vector<1x8xf32>,
    return
  }
  func.func @transform_0(%arg0: i32) -> (i32, i32) {
    %c0_i32 = arith.constant 0 : i32
    %c0_i32_0 = arith.constant 0 : i32
    %c0_i32_1 = arith.constant 0 : i32
    return %c0_i32, %c0_i32_0 : i32, i32
  }
  func.func @transform_1(%arg0: i32) -> (i32, i32) {
    %c0_i32 = arith.constant 0 : i32
    %c0_i32_0 = arith.constant 0 : i32
    return %c0_i32, %arg0 : i32, i32
  }
  func.func @transform_2(%arg0: i32) -> (i32, i32) {
    %c0_i32 = arith.constant 0 : i32
    %c0_i32_0 = arith.constant 0 : i32
    return %c0_i32, %arg0 : i32, i32
  }
  func.func @transform_3(%arg0: i32) -> (i32, i32) {
    %c0_i32 = arith.constant 0 : i32
    %c0_i32_0 = arith.constant 0 : i32
    return %c0_i32, %arg0 : i32, i32
  }
  func.func @transform_4(%arg0: i32) -> (i32, i32) {
    %c0_i32 = arith.constant 0 : i32
    %c0_i32_0 = arith.constant 0 : i32
    return %c0_i32, %arg0 : i32, i32
  }
}

</mosaic_0001>

<llo_original>
// kernel: tpu_custom_call.1
$region0: #{tpu_custom_call.1}
  #allocation0 [shape = 'u32[]', space=smem, size = 0x4, offset = 0x4, fixed_abs, tag = 'smem constant byte address 0x4 - core index']
  #allocation1 [shape = 'u32[144,128]{1,0:T(1,128)}', space=vmem, size = 0x12000, scoped, tag = 'internal scratch']
  %s0 = inlined_call_operand.vmem [shape: bf16[8,128], index: 0, kind: input, shape index: {}]
  %s1 = inlined_call_operand.vmem [shape: bf16[128,8], index: 1, kind: input, shape index: {}]
  %s2 = inlined_call_operand.vmem [shape: s32[1,8], index: 2, kind: input, shape index: {}]
  %s3 = inlined_call_operand.vmem [shape: s32[1,8], index: 3, kind: input, shape index: {}]
  %s4 = inlined_call_operand.hbm [shape: f32[1,8], index: 4, kind: output, shape index: {}]
  %s5 = sld [smem:[#allocation0]]
  $region26: #{tpu_custom_call.1} parent=0
    _
  %s7 = ssub.s32 1, %s5
  %s8 = scalar_select 0, %s7, %s5
  $region1: #{tpu_custom_call.1} parent=0
    #allocation2 [shape = 'u8[512]{0}', space=vmem, size = 0x400, scoped, tag = 'output window, operand 0, single buffered']
    #allocation3 [shape = 's32[1]{0}', space=sflag, size = 0x4, scoped, tag = 'scoped memory for tpu_custom_call.1']
    %9 = vsyncpa [#allocation3], 0
    // Predicated region
    $region2: #{tpu_custom_call.1} parent=1 // pred_check
      _
    $region3: #{tpu_custom_call.1} parent=1 // pred_check_branch
      %11 = sbr.rel (0) target = $region5
    $region4: #{tpu_custom_call.1} parent=1 // pred_region
      _
    $region5: #{tpu_custom_call.1} parent=1 // pred_fallthru
      _
    // Predicated region
    $region6: #{tpu_custom_call.1} parent=1 // pred_check
      _
    $region7: #{tpu_custom_call.1} parent=1 // pred_check_branch
      %13 = sbr.rel (0) target = $region9
    $region8: #{tpu_custom_call.1} parent=1 // pred_region
      _
    $region9: #{tpu_custom_call.1} parent=1 // pred_fallthru
      _
    // Predicated region
    $region10: #{tpu_custom_call.1} parent=1 // pred_check
      _
    $region11: #{tpu_custom_call.1} parent=1 // pred_check_branch
      %15 = sbr.rel (0) target = $region13
    $region12: #{tpu_custom_call.1} parent=1 // pred_region
      _
    $region13: #{tpu_custom_call.1} parent=1 // pred_fallthru
      _
    // Predicated region
    $region14: #{tpu_custom_call.1} parent=1 // pred_check
      _
    $region15: #{tpu_custom_call.1} parent=1 // pred_check_branch
      %17 = sbr.rel (0) target = $region17
    $region16: #{tpu_custom_call.1} parent=1 // pred_region
      _
    $region17: #{tpu_custom_call.1} parent=1 // pred_fallthru
      _
    %v19 = vld [vmem:[%s0] sm:$0xf]
    %v20 = vld [vmem:[%s1] sm:$0xf]
    %v21 = vld [vmem:[%s1 + $0x4] sm:$0xf]
    %v22 = vld [vmem:[%s1 + $0x8] sm:$0xf]
    %v23 = vld [vmem:[%s1 + $0xc] sm:$0xf]
    %v24 = vld [vmem:[%s1 + $0x10] sm:$0xf]
    %v25 = vld [vmem:[%s1 + $0x14] sm:$0xf]
    %v26 = vld [vmem:[%s1 + $0x18] sm:$0xf]
    %v27 = vld [vmem:[%s1 + $0x1c] sm:$0xf]
    %v28 = vld [vmem:[%s1 + $0x20] sm:$0xf]
    %v29 = vld [vmem:[%s1 + $0x24] sm:$0xf]
    %v30 = vld [vmem:[%s1 + $0x28] sm:$0xf]
    %v31 = vld [vmem:[%s1 + $0x2c] sm:$0xf]
    %v32 = vld [vmem:[%s1 + $0x30] sm:$0xf]
    %v33 = vld [vmem:[%s1 + $0x34] sm:$0xf]
    %v34 = vld [vmem:[%s1 + $0x38] sm:$0xf]
    %v35 = vld [vmem:[%s1 + $0x3c] sm:$0xf]
    %v52 = vunpack.c.l.b16 %v20
    %v53 = vunpack.c.l.b16 %v21
    %v54 = vunpack.c.l.b16 %v22
    %v55 = vunpack.c.l.b16 %v23
    %v56 = vunpack.c.l.b16 %v24
    %v57 = vunpack.c.l.b16 %v25
    %v58 = vunpack.c.l.b16 %v26
    %v59 = vunpack.c.l.b16 %v27
    %v60 = vunpack.c.l.b16 %v28
    %v61 = vunpack.c.l.b16 %v29
    %v62 = vunpack.c.l.b16 %v30
    %v63 = vunpack.c.l.b16 %v31
    %v64 = vunpack.c.l.b16 %v32
    %v65 = vunpack.c.l.b16 %v33
    %v66 = vunpack.c.l.b16 %v34
    %v67 = vunpack.c.l.b16 %v35
    %v68 = vpack.c.b16 %v53, %v52
    %v69 = vpack.c.b16 %v55, %v54
    %v70 = vpack.c.b16 %v57, %v56
    %v71 = vpack.c.b16 %v59, %v58
    %v72 = vpack.c.b16 %v61, %v60
    %v73 = vpack.c.b16 %v63, %v62
    %v74 = vpack.c.b16 %v65, %v64
    %v75 = vpack.c.b16 %v67, %v66
    %84 = vmatprep.subr.bf16.mxu0 0
    %85 = vmatpush1.bf16.msra.mxu0 %v68
    %86 = vmatprep.subr.bf16.mxu0 0
    %87 = vmatpush1.bf16.msra.mxu0 %v69
    %88 = vmatprep.subr.bf16.mxu0 0
    %89 = vmatpush1.bf16.msra.mxu0 %v70
    %90 = vmatprep.subr.bf16.mxu0 0
    %91 = vmatpush1.bf16.msra.mxu0 %v71
    %92 = vmatprep.subr.bf16.mxu0 0
    %93 = vmatpush1.bf16.msra.mxu0 %v72
    %94 = vmatprep.subr.bf16.mxu0 0
    %95 = vmatpush1.bf16.msra.mxu0 %v73
    %96 = vmatprep.subr.bf16.mxu0 0
    %97 = vmatpush1.bf16.msra.mxu0 %v74
    %98 = vmatprep.subr.bf16.mxu0 0
    %99 = vmatpush1.bf16.msra.mxu0 %v75
    %100 = vmatprep.subr.bf16.mxu0 0
    %101 = vmatpush1.bf16.msra.mxu0 0
    %102 = vmatprep.subr.bf16.mxu0 0
    %103 = vmatpush1.bf16.msra.mxu0 0
    %104 = vmatprep.subr.bf16.mxu0 0
    %105 = vmatpush1.bf16.msra.mxu0 0
    %106 = vmatprep.subr.bf16.mxu0 0
    %107 = vmatpush1.bf16.msra.mxu0 0
    %108 = vmatprep.subr.bf16.mxu0 0
    %109 = vmatpush1.bf16.msra.mxu0 0
    %110 = vmatprep.subr.bf16.mxu0 0
    %111 = vmatpush1.bf16.msra.mxu0 0
    %112 = vmatprep.subr.bf16.mxu0 0
    %113 = vmatpush1.bf16.msra.mxu0 0
    %114 = vmatprep.subr.bf16.mxu0 0
    %115 = vmatpush1.bf16.msra.mxu0 0
    %116 = vmatprep.mubr.bf16.mxu0 0
    %117 = vmatmul.mubr.bf16.gmra.mrb[0].mxu0 %v19
    %v118 = vpop.f32.mrb[0].mxu0
    %v119 = vadd.f32 0.0, %v118
    %v120 = vpop.f32.mrb[0].mxu0
    %v121 = vpop.f32.mrb[0].mxu0
    %v122 = vpop.f32.mrb[0].mxu0
    %123 = vdwg.mxu0
    %v124 = vlaneseq
    %v125 = vshrl.u32 %v124, 7
    %v126 = vld [vmem:[%s2] sm:$0x1]
    %v127 = vlaneseq
    %v128 = vshrl.u32 %v127, 7
    %v129 = vsub.s32 0, %v128
    %v130 = vrot.slane %v126, %v129
    %vm131 = vcmp.eq.s32.totalorder %v125, %v130
    %v132 = vsel %vm131, %v119, 0.0
    %vm133 = vcmask 64512
    %v134 = vsel %vm133, %v132, 0.0
    %v135 = vrot.slane %v134, 4
    %v136 = vadd.f32 %v134, %v135
    %v137 = vrot.slane %v136, 2
    %v138 = vadd.f32 %v136, %v137
    %v139 = vrot.slane %v138, 1
    %v140 = vadd.f32 %v138, %v139
    %v141 = vld [vmem:[%s3] sm:$0x1]
    %v142 = vlaneseq
    %v143 = vshrl.u32 %v142, 7
    %v144 = vsub.s32 0, %v143
    %v145 = vrot.slane %v141, %v144
    %vm146 = vcmp.eq.s32.totalorder %v125, %v145
    %v147 = vsel %vm146, %v119, 0.0
    %v148 = vsel %vm133, %v147, 0.0
    %v149 = vrot.slane %v148, 4
    %v150 = vadd.f32 %v148, %v149
    %v151 = vrot.slane %v150, 2
    %v152 = vadd.f32 %v150, %v151
    %v153 = vrot.slane %v152, 1
    %v154 = vadd.f32 %v152, %v153
    %v155 = vmax.f32 %v140, 0.0
    %v156 = vmax.f32 %v154, 0.0
    %v157 = vsub.f32 %v155, %v156
    %v158 = vsub.f32 1.0, %v157
    %v159 = vmax.f32 %v158, 0.0
    %vm160 = vcmask 57344
    %161 = vst.msk [vmem:[#allocation2] sm:$0x1] %vm160, %v159
    // Predicated region
    $region18: #{tpu_custom_call.1} parent=1 // pred_check
      _
    $region19: #{tpu_custom_call.1} parent=1 // pred_check_branch
      %163 = sbr.rel (0) target = $region21
    $region20: #{tpu_custom_call.1} parent=1 // pred_region
      %s165 = ssub.s32 16, 16
      %166 = vsyncadd [#allocation3], %s165
      %s168 = sshll.u32 [#allocation2], 4
      %s169 = int_to_ptr.vmem [resolvable:$true] %s168
      %171 = dma.vmem_to_hbm [thread:$0]  %s169, 16, %s4, [#allocation3]
    $region21: #{tpu_custom_call.1} parent=1 // pred_fallthru
      _
    // Predicated region
    $region22: #{tpu_custom_call.1} parent=1 // pred_check
      _
    $region23: #{tpu_custom_call.1} parent=1 // pred_check_branch
      %173 = sbr.rel (0) target = $region25
    $region24: #{tpu_custom_call.1} parent=1 // pred_region
      %174 = dma.done [#allocation3], 16
    $region25: #{tpu_custom_call.1} parent=1 // pred_fallthru
      _
    %175 = vsyncpa [#allocation3], 1

</llo_original>
